<compile_context>
chip_gen: v5e
topology: v5e:2x2
jax: 0.10.0
libtpu: 0.0.40
codegen_flags: <defaults>
</compile_context>

<pallas_src>
import functools

import jax
import jax.numpy as jnp
from jax.experimental import pallas as pl
from jax.experimental.pallas import tpu as pltpu

LANES = 128                    # TPU lane width; feature dims padded to a multiple of this
MXU_DTYPE = jnp.bfloat16       # MXU input dtype (accumulation stays f32)
ACT_DTYPE = jnp.bfloat16       # inter-layer activation dtype; final output is f32
LN_EPS = 1e-5
_MIB = 1024 * 1024


def _round_up(x, m):
    return (x + m - 1) // m * m


# ---------------------------------------------------------------------------
# Per-layer fused kernel:  out = PReLU( LayerNorm( (A @ x) [@ W] + b ) )
# Grid = (row tiles of A, K tiles of A).  The K axis accumulates A@x into an
# f32 VMEM scratch; the transform / LayerNorm / PReLU epilogue runs once per
# row tile at the last K step and writes the output tile directly.
# ---------------------------------------------------------------------------
def gcn_layer_kernel(inv_fout, apply_w, *refs):
    if apply_w:
        a_ref, x_ref, w_ref, b_ref, g_ref, be_ref, alpha_ref, o_ref, acc_ref = refs
    else:  # x already holds h @ W (weight-first order); skip the in-kernel transform
        a_ref, x_ref, b_ref, g_ref, be_ref, alpha_ref, o_ref, acc_ref = refs

    k = pl.program_id(1)

    @pl.when(k == 0)
    def _():
        acc_ref[...] = jnp.zeros_like(acc_ref)

    acc_ref[...] += jnp.dot(a_ref[...], x_ref[...],
                            preferred_element_type=jnp.float32)

    @pl.when(k == pl.num_programs(1) - 1)
    def _():
        acc = acc_ref[...]
        if apply_w:
            z = jnp.dot(acc.astype(MXU_DTYPE), w_ref[...],
                        preferred_element_type=jnp.float32)
        else:
            z = acc
        z = z + b_ref[...]
        # Padded output lanes of z are exact zeros (zero-padded W columns / bias), so
        # one-pass moments over all lanes equal the moments over the true fout lanes.
        mean = jnp.sum(z, axis=-1, keepdims=True) * inv_fout
        ex2 = jnp.sum(z * z, axis=-1, keepdims=True) * inv_fout
        var = jnp.maximum(ex2 - mean * mean, 0.0)        # guard one-pass cancellation
        zn = (z - mean) * jax.lax.rsqrt(var + LN_EPS)
        zn = zn * g_ref[...] + be_ref[...]               # zero gamma re-zeroes padded lanes
        alpha = alpha_ref[0]
        h = jnp.where(zn >= 0, zn, alpha * zn)           # PReLU (single shared slope)
        o_ref[...] = h.astype(o_ref.dtype)


def feat_transform_kernel(x_ref, w_ref, o_ref):
    """Row-tiled x @ W (weight-first order, used when fout_pad < fin_pad)."""
    o_ref[...] = jnp.dot(x_ref[...], w_ref[...],
                         preferred_element_type=jnp.float32).astype(o_ref.dtype)


# ---------------------------------------------------------------------------
# Tile / VMEM sizing.
# ---------------------------------------------------------------------------
def _pick_tiles_and_vmem(n, feat_dims):
    """Pick a square A tile (dividing the lane-padded N) and a scoped-VMEM limit.

    TODO(synk): finer per-generation tuning (v7x: 64 MiB physical VMEM, prefer
    TM=256-512; v5e/v6e: 128 MiB, TM up to 1024)."""
    pads = [_round_up(f, LANES) for f in feat_dims]
    fmax = max(pads)
    fout_max = max(pads[1:])
    try:
        info = pltpu.get_tpu_info()
        phys = getattr(info, "vmem_capacity_bytes", 64 * _MIB)
    except Exception:  # pragma: no cover - conservative fallback
        phys = 64 * _MIB                       # v7x floor; safe on v5e/v6e too
    budget = int(phys * 0.55)

    n128 = _round_up(n, LANES)

    def need(t):
        a = 2 * t * t * 2                      # A tile, bf16, double-buffered
        x = 2 * t * fmax * 2                   # x tile, bf16, double-buffered
        w = 2 * fmax * fmax * 2                # resident weight, bf16, double-buffered
        o = 2 * t * fout_max * 4               # output tile (<= f32), double-buffered
        acc = t * fmax * 4                     # f32 accumulator scratch
        small = 8 * fout_max * 4               # bias / gamma / beta
        return a + x + w + o + acc + small

    tile = LANES
    for t in (1024, 512, 256, 128):
        if n128 % t == 0 and need(t) <= budget:
            tile = t
            break
    vmem_limit = int(min(max(int(need(tile) * 1.5) + 4 * _MIB, 16 * _MIB), 56 * _MIB))
    return tile, tile, vmem_limit


# ---------------------------------------------------------------------------
# One GraphConv + LayerNorm + PReLU layer.
# ---------------------------------------------------------------------------
def _gcn_layer(a_pad, x, w_p, b_p, g_p, be_p, alpha, fout, tm, tk, out_dtype,
               vmem_limit):
    n_pad = a_pad.shape[0]
    fin_p = x.shape[1]
    fout_p = w_p.shape[1]
    # Cheaper matmul order (same heuristic as dgl.GraphConv, on padded widths so the
    # choice actually changes MXU work): transform first when it shrinks the features.
    weight_first = fout_p < fin_p

    if weight_first:
        x = pl.pallas_call(
            feat_transform_kernel,
            out_shape=jax.ShapeDtypeStruct((n_pad, fout_p), ACT_DTYPE),
            grid_spec=pltpu.PrefetchScalarGridSpec(
                num_scalar_prefetch=0,
                grid=(n_pad // tm,),
                in_specs=[pl.BlockSpec((tm, fin_p), lambda i: (i, 0)),
                          pl.BlockSpec((fin_p, fout_p), lambda i: (0, 0))],
                out_specs=pl.BlockSpec((tm, fout_p), lambda i: (i, 0))),
            compiler_params=pltpu.CompilerParams(
                dimension_semantics=("parallel",),
                vmem_limit_bytes=vmem_limit),
        )(x, w_p)

    acc_w = x.shape[1]                  # width of the A@x accumulator
    kernel = functools.partial(gcn_layer_kernel, 1.0 / fout, not weight_first)

    in_specs = [pl.BlockSpec((tm, tk), lambda i, k: (i, k)),         # A tile (bf16)
                pl.BlockSpec((tk, acc_w), lambda i, k: (k, 0))]      # x tile (bf16)
    operands = [a_pad, x]
    if not weight_first:
        in_specs.append(pl.BlockSpec((fin_p, fout_p), lambda i, k: (0, 0)))
        operands.append(w_p)
    in_specs += [pl.BlockSpec((1, fout_p), lambda i, k: (0, 0)),     # bias
                 pl.BlockSpec((1, fout_p), lambda i, k: (0, 0)),     # LN gamma
                 pl.BlockSpec((1, fout_p), lambda i, k: (0, 0)),     # LN beta
                 pl.BlockSpec(memory_space=pltpu.MemorySpace.SMEM)]  # PReLU alpha
    operands += [b_p, g_p, be_p, alpha]

    return pl.pallas_call(
        kernel,
        out_shape=jax.ShapeDtypeStruct((n_pad, fout_p), out_dtype),
        grid_spec=pltpu.PrefetchScalarGridSpec(
            num_scalar_prefetch=0,
            grid=(n_pad // tm, n_pad // tk),
            in_specs=in_specs,
            out_specs=pl.BlockSpec((tm, fout_p), lambda i, k: (i, 0)),
            scratch_shapes=[pltpu.VMEM((tm, acc_w), jnp.float32)]),
        compiler_params=pltpu.CompilerParams(
            dimension_semantics=("parallel", "arbitrary"),
            vmem_limit_bytes=vmem_limit),
    )(*operands)


# ---------------------------------------------------------------------------
# Full GCN forward.
# ---------------------------------------------------------------------------
def gcn_forward(a_hat, features, params, feat_dims):
    """Full GCN forward. Returns [N, feat_dims[-1]] f32."""
    n = features.shape[0]
    num_layers = len(params)
    tm, tk, vmem_limit = _pick_tiles_and_vmem(n, feat_dims)
    n_pad = _round_up(n, max(tm, tk))

    # Symmetrically-normalized adjacency, padded to the tile grid, bf16 for the MXU.
    a_pad = jnp.zeros((n_pad, n_pad), MXU_DTYPE).at[:n, :n].set(a_hat.astype(MXU_DTYPE))
    # TODO(synk): on v7x the aggregation matmul could take an fp8(e4m3) A_hat
    # (values in [0,1]) for 2x A footprint/throughput; not applicable on v5e/v6e.

    fin0_p = _round_up(feat_dims[0], LANES)
    h = jnp.zeros((n_pad, fin0_p), ACT_DTYPE).at[:n, :feat_dims[0]].set(
        features.astype(ACT_DTYPE))

    for i, p in enumerate(params):
        fin, fout = feat_dims[i], feat_dims[i + 1]
        fin_p, fout_p = _round_up(fin, LANES), _round_up(fout, LANES)
        final = (i == num_layers - 1)

        # Per-layer padded, pre-cast parameters (no [L, FPmax, FPmax] stack, no
        # in-kernel weight cast). Padded lanes stay exact zeros by construction.
        w_p = jnp.zeros((fin_p, fout_p), MXU_DTYPE).at[:fin, :fout].set(
            p["w"].astype(MXU_DTYPE))
        b_p = jnp.zeros((1, fout_p), jnp.float32).at[0, :fout].set(p["b"])
        g_p = jnp.zeros((1, fout_p), jnp.float32).at[0, :fout].set(p["gamma"])
        be_p = jnp.zeros((1, fout_p), jnp.float32).at[0, :fout].set(p["beta"])
        alpha = jnp.asarray(p["alpha"], jnp.float32).reshape(1)

        # Dropout between layers: module built with dropout=0.0 -> identity.
        # TODO(synk): add in-kernel pltpu.prng_* dropout if a training-mode p > 0 is needed.
        out_dtype = jnp.float32 if final else ACT_DTYPE
        h = _gcn_layer(a_pad, h, w_p, b_p, g_p, be_p, alpha, fout,
                       tm, tk, out_dtype, vmem_limit)

    return h[:n, :feat_dims[-1]]


def make_params(key, feat_dims):
    params = []
    for fi, fo in zip(feat_dims[:-1], feat_dims[1:]):
        key, kw = jax.random.split(key)
        # xavier_uniform (dgl GraphConv default weight init)
        limit = (6.0 / (fi + fo)) ** 0.5
        w = jax.random.uniform(kw, (fi, fo), jnp.float32, -limit, limit)
        params.append(dict(
            w=w,
            b=jnp.zeros((fo,), jnp.float32),       # GraphConv bias init: zeros
            gamma=jnp.ones((fo,), jnp.float32),    # LayerNorm weight init: ones
            beta=jnp.zeros((fo,), jnp.float32),    # LayerNorm bias init: zeros
            alpha=jnp.float32(0.25),               # PReLU init: 0.25
        ))
    return params


if __name__ == "__main__":
    N = 384             # number of graph nodes (exercises a (3, 3) tile grid)
    IN_FEATS = 160      # pads to 256 lanes -> layer 1 uses the weight-first path
    HIDDEN_LST = [64, 32]

    key = jax.random.PRNGKey(0)
    k_adj, k_feat, k_par = jax.random.split(key, 3)

    # Deterministic random undirected graph (dense adjacency, no self loops).
    adj = (jax.random.uniform(k_adj, (N, N)) < 0.05).astype(jnp.float32)
    adj = jnp.maximum(adj, adj.T)
    adj = adj * (1.0 - jnp.eye(N, dtype=jnp.float32))

    # Symmetric GCN normalization, degree clamped to >= 1 (allow_zero_in_degree=True).
    deg = jnp.maximum(adj.sum(axis=1), 1.0)
    d_inv_sqrt = 1.0 / jnp.sqrt(deg)
    a_hat = d_inv_sqrt[:, None] * adj * d_inv_sqrt[None, :]

    features = jax.random.normal(k_feat, (N, IN_FEATS), jnp.float32)
    feat_dims = [IN_FEATS] + HIDDEN_LST
    params = make_params(k_par, feat_dims)

    out = gcn_forward(a_hat, features, params, feat_dims)
    out = jax.block_until_ready(out)
    assert out.shape == (N, HIDDEN_LST[-1]), out.shape
    assert bool(jnp.all(jnp.isfinite(out))), "non-finite output"
    print("KERNEL_OK")
</pallas_src>

<mosaic_0001>
module attributes {stable_mosaic.version = 11 : i64} {
  func.func @feat_transform_kernel(%arg0: i32, %arg1: memref<128x256xbf16, #tpu.memory_space<vmem>>, %arg2: memref<256x128xbf16, #tpu.memory_space<vmem>>, %arg3: memref<128x128xbf16, #tpu.memory_space<vmem>>) attributes {dimension_semantics = [#tpu.dimension_semantics<parallel>], iteration_bounds = array<i64: 3>, scalar_prefetch = 0 : i64, scratch_operands = 0 : i64, tpu.core_type = #tpu.core_type<tc>, window_params = [{transform_indices = @transform_0, window_bounds = array<i64: 128, 256>}, {pipeline_mode = #tpu.pipeline_mode<synchronous>, transform_indices = @transform_1, window_bounds = array<i64: 256, 128>}, {transform_indices = @transform_2, window_bounds = array<i64: 128, 128>}]} {
    %c0 = arith.constant 0 : index
    %c0_0 = arith.constant 0 : index
    %0 = vector.load %arg1[%c0, %c0_0] : memref<128x256xbf16, #tpu.memory_space<vmem>>, vector<128x256xbf16>
    %c0_1 = arith.constant 0 : index
    %c0_2 = arith.constant 0 : index
    %1 = vector.load %arg2[%c0_1, %c0_2] : memref<256x128xbf16, #tpu.memory_space<vmem>>, vector<256x128xbf16>
    %cst = arith.constant dense<0.000000e+00> : vector<128x128xf32>
    %2 = tpu.matmul %0, %1, %cst {dimension_numbers = #tpu.dot_dimension_numbers<[1], [0], [0], [1], [0, 0, 1, 1], [], []>} : vector<128x256xbf16>, vector<256x128xbf16>, vector<128x128xf32> -> vector<128x128xf32>
    %3 = arith.truncf %2 : vector<128x128xf32> to vector<128x128xbf16>
    %c0_3 = arith.constant 0 : index
    %c0_4 = arith.constant 0 : index
    %4 = vector.load %arg3[%c0_3, %c0_4] : memref<128x128xbf16, #tpu.memory_space<vmem>>, vector<128x128xbf16>
    tpu.vector_store %arg3[%c0_3, %c0_4], %3 {strides = array<i32>} : memref<128x128xbf16, #tpu.memory_space<vmem>>, vector<128x128xbf16>,
    return
  }
  func.func @transform_0(%arg0: i32) -> (i32, i32) {
    %c0_i32 = arith.constant 0 : i32
    %c0_i32_0 = arith.constant 0 : i32
    return %arg0, %c0_i32 : i32, i32
  }
  func.func @transform_1(%arg0: i32) -> (i32, i32) {
    %c0_i32 = arith.constant 0 : i32
    %c0_i32_0 = arith.constant 0 : i32
    %c0_i32_1 = arith.constant 0 : i32
    return %c0_i32, %c0_i32_0 : i32, i32
  }
  func.func @transform_2(%arg0: i32) -> (i32, i32) {
    %c0_i32 = arith.constant 0 : i32
    %c0_i32_0 = arith.constant 0 : i32
    return %arg0, %c0_i32 : i32, i32
  }
}

</mosaic_0001>

<llo_original>
// kernel: tpu_custom_call.1
$region0: #{tpu_custom_call.1}
  #allocation0 [shape = 'u32[]', space=smem, size = 0x4, offset = 0x4, fixed_abs, tag = 'smem constant byte address 0x4 - core index']
  #allocation1 [shape = 'u32[72,128]{1,0:T(1,128)}', space=vmem, size = 0x9000, scoped, tag = 'internal scratch']
  %s0 = inlined_call_operand.hbm [shape: bf16[384,256], index: 0, kind: input, shape index: {}]
  %s1 = inlined_call_operand.hbm [shape: bf16[256,128], index: 1, kind: input, shape index: {}]
  %s2 = inlined_call_operand.hbm [shape: bf16[384,128], index: 2, kind: output, shape index: {}]
  %s3 = sld [smem:[#allocation0]]
  $region49: #{tpu_custom_call.1} parent=0
    _
  %s5 = ssub.s32 1, %s3
  %s6 = scalar_select 0, %s5, %s3
  $region1: #{tpu_custom_call.1} parent=0
    #allocation2 [shape = 'u8[131072]{0}', space=vmem, size = 0x20000, scoped, tag = 'input window, operand 0']
    #allocation3 [shape = 's32[2]{0}', space=sflag, size = 0x8, scoped, tag = 'scoped memory for tpu_custom_call.1']
    #allocation4 [shape = 's32[2]{0}', space=sflag, size = 0x8, scoped, tag = 'scoped memory for tpu_custom_call.1']
    #allocation5 [shape = 'u8[65536]{0}', space=vmem, size = 0x10000, scoped, tag = 'input window, operand 1, single buffered']
    #allocation6 [shape = 's32[1]{0}', space=sflag, size = 0x4, scoped, tag = 'scoped memory for tpu_custom_call.1']
    #allocation7 [shape = 'u8[65536]{0}', space=vmem, size = 0x10000, scoped, tag = 'output window, operand 0']
    %7 = vsyncpa [#allocation3], 0
    %s8 = scalar_lea.sflag [#allocation3], 1
    %9 = vsyncpa %s8, 0
    %10 = vsyncpa [#allocation6], 0
    %11 = vsyncpa [#allocation4], 0
    %s12 = scalar_lea.sflag [#allocation4], 1
    %13 = vsyncpa %s12, 0
    loop: start=0, step=1, limit=5
    $region2: #{tpu_custom_call.1} parent=1 // loop_pre_header
      _
    $region3: #{tpu_custom_call.1} parent=1 // loop_header
      %s15 = sphi 0, %s19
      %p16 = scmp.ge.s32.totalorder %s15, 5
      %s25 = sphi 0, %s27
      %s28 = sphi 0, %s25
      %s29 = sphi 0, %s28
      %s45 = sphi 0, %s29
      %s49 = sphi 0, %s49
      %s51 = sphi 0, %s49
      %s52 = sphi 0, %s51
      %s66 = sphi 0, %s52
      %s72 = sphi 0, %s74
      %s75 = sphi 0, %s72
      %s76 = sphi 0, %s75
      %s92 = sphi 0, %s76
    $region4: #{tpu_custom_call.1} parent=1 // loop_header_branch
      %18 = sbr.rel (%p16) target = $region8
    $region5: #{tpu_custom_call.1} parent=1 // loop_body
      %s20 = ssub.s32 %s15, 1
      %s21 = ssub.s32 %s15, 2
      %s22 = sadd.s32 %s15, 1
      %s23 = ssub.s32 %s15, %s22
      %p24 = scmp.eq.s32.totalorder %s23, 0
      %s26 = sadd.s32 %s25, 1
      %s27 = scalar_select %p24, %s25, %s26
      %p30 = pneg %p24
      %p31 = scmp.eq.s32.totalorder %s15, 2
      %p32 = por %p30, %p31
      %p33 = scmp.ne.s32.totalorder %s25, %s28
      %p34 = scmp.eq.s32.totalorder %s15, 0
      %p35 = por %p33, %p34
      %p36 = scmp.ne.s32.totalorder %s25, %s28
      %p37 = scmp.eq.s32.totalorder %s20, 2
      %p38 = por %p36, %p37
      %p39 = scmp.ne.s32.totalorder %s28, %s29
      %p40 = scmp.eq.s32.totalorder %s20, 0
      %p41 = por %p39, %p40
      %p42 = scmp.ne.s32.totalorder %s28, %s29
      %p43 = scmp.eq.s32.totalorder %s21, 2
      %p44 = por %p42, %p43
      %p46 = scmp.ne.s32.totalorder %s29, %s45
      %p47 = scmp.eq.s32.totalorder %s21, 0
      %p48 = por %p46, %p47
      %s50 = sadd.s32 %s49, 1
      %p53 = scmp.eq.s32.totalorder %s15, 2
      %p54 = scmp.ne.s32.totalorder %s49, %s51
      %p55 = scmp.eq.s32.totalorder %s15, 0
      %p56 = por %p54, %p55
      %p57 = scmp.ne.s32.totalorder %s49, %s51
      %p58 = scmp.eq.s32.totalorder %s20, 2
      %p59 = por %p57, %p58
      %p60 = scmp.ne.s32.totalorder %s51, %s52
      %p61 = scmp.eq.s32.totalorder %s20, 0
      %p62 = por %p60, %p61
      %p63 = scmp.ne.s32.totalorder %s51, %s52
      %p64 = scmp.eq.s32.totalorder %s21, 2
      %p65 = por %p63, %p64
      %p67 = scmp.ne.s32.totalorder %s52, %s66
      %p68 = scmp.eq.s32.totalorder %s21, 0
      %p69 = por %p67, %p68
      %s70 = ssub.s32 %s15, %s22
      %p71 = scmp.eq.s32.totalorder %s70, 0
      %s73 = sadd.s32 %s72, 1
      %s74 = scalar_select %p71, %s72, %s73
      %p77 = pneg %p71
      %p78 = scmp.eq.s32.totalorder %s15, 2
      %p79 = por %p77, %p78
      %p80 = scmp.ne.s32.totalorder %s72, %s75
      %p81 = scmp.eq.s32.totalorder %s15, 0
      %p82 = por %p80, %p81
      %p83 = scmp.ne.s32.totalorder %s72, %s75
      %p84 = scmp.eq.s32.totalorder %s20, 2
      %p85 = por %p83, %p84
      %p86 = scmp.ne.s32.totalorder %s75, %s76
      %p87 = scmp.eq.s32.totalorder %s20, 0
      %p88 = por %p86, %p87
      %p89 = scmp.ne.s32.totalorder %s75, %s76
      %p90 = scmp.eq.s32.totalorder %s21, 2
      %p91 = por %p89, %p90
      %p93 = scmp.ne.s32.totalorder %s76, %s92
      %p94 = scmp.eq.s32.totalorder %s21, 0
      %p95 = por %p93, %p94
      %p96 = scmp.le.s32.totalorder 1, %s15
      %p97 = scmp.lt.s32.totalorder %s15, 4
      %p98 = pnand %p96, %p97
      %p99 = pneg %p98
      // Predicated region
      $region9: #{tpu_custom_call.1} parent=5 // pred_check
        _
      $region10: #{tpu_custom_call.1} parent=5 // pred_check_branch
        %101 = sbr.rel (%p98) target = $region12
      $region11: #{tpu_custom_call.1} parent=5 // pred_region
        %s102 = ssub.s32 %s15, 1
        // Predicated region
        $region13: #{tpu_custom_call.1} parent=11 // pred_check
          %p103 = pneg %p62
        $region14: #{tpu_custom_call.1} parent=11 // pred_check_branch
          %105 = sbr.rel (%p103) target = $region16
        $region15: #{tpu_custom_call.1} parent=11 // pred_region
          %107 = vsyncadd [#allocation6], 0
          %s108 = sshll.u32 %s1, 4
          %s109 = int_to_ptr.hbm [resolvable:$true] %s108
          %s110 = sshll.u32 [#allocation5], 4
          %s111 = int_to_ptr.vmem [resolvable:$true] %s110
          %116 = dma.hbm_to_vmem [thread:$0]  %s109, 2048, %s111, [#allocation6], 64, 64, 4
        $region16: #{tpu_custom_call.1} parent=11 // pred_fallthru
          _
      $region12: #{tpu_custom_call.1} parent=5 // pred_fallthru
        _
      %p117 = scmp.lt.s32.totalorder %s15, 3
      // Predicated region
      $region17: #{tpu_custom_call.1} parent=5 // pred_check
        %p118 = pneg %p117
      $region18: #{tpu_custom_call.1} parent=5 // pred_check_branch
        %120 = sbr.rel (%p118) target = $region20
      $region19: #{tpu_custom_call.1} parent=5 // pred_region
        // Predicated region
        $region21: #{tpu_custom_call.1} parent=19 // pred_check
          %p121 = pneg %p35
        $region22: #{tpu_custom_call.1} parent=19 // pred_check_branch
          %123 = sbr.rel (%p121) target = $region24
        $region23: #{tpu_custom_call.1} parent=19 // pred_region
          %s124 = sand.u32 %s25, 1
          %s125 = scalar_lea.sflag [#allocation3], %s124
          %s126 = sand.u32 %s25, 1
          %s127 = smul.addr %s126, 128
          %s128 = scalar_lea.vmem [#allocation2], %s127
          %s129 = smul.u32 16, %s15
          %131 = vsyncadd %s125, 0
          %s132 = smul.addr %s129, 2
          %s133 = smul.addr %s132, 4
          %s134 = scalar_lea.hbm %s0, %s133
          %s135 = sshll.u32 %s134, 4
          %s136 = int_to_ptr.hbm [resolvable:$true] %s135
          %s137 = sshll.u32 %s128, 4
          %s138 = int_to_ptr.vmem [resolvable:$true] %s137
          %143 = dma.hbm_to_vmem [thread:$0]  %s136, 2048, %s138, %s125, 128, 128, 8
        $region24: #{tpu_custom_call.1} parent=19 // pred_fallthru
          _
      $region20: #{tpu_custom_call.1} parent=5 // pred_fallthru
        _
      %p144 = scmp.le.s32.totalorder 1, %s15
      %p145 = scmp.lt.s32.totalorder %s15, 4
      %p146 = pnand %p144, %p145
      %p147 = pneg %p146
      // Predicated region
      $region25: #{tpu_custom_call.1} parent=5 // pred_check
        _
      $region26: #{tpu_custom_call.1} parent=5 // pred_check_branch
        %149 = sbr.rel (%p146) target = $region28
      $region27: #{tpu_custom_call.1} parent=5 // pred_region
        %s150 = ssub.s32 %s15, 1
        %s151 = sand.u32 %s28, 1
        %s152 = scalar_lea.sflag [#allocation3], %s151
        %s153 = sand.u32 %s28, 1
        %s154 = smul.addr %s153, 128
        %s155 = scalar_lea.vmem [#allocation2], %s154
        // Predicated region
        $region29: #{tpu_custom_call.1} parent=27 // pred_check
          %p156 = pneg %p41
        $region30: #{tpu_custom_call.1} parent=27 // pred_check_branch
          %158 = sbr.rel (%p156) target = $region32
        $region31: #{tpu_custom_call.1} parent=27 // pred_region
          %160 = dma.done %s152, 2048
        $region32: #{tpu_custom_call.1} parent=27 // pred_fallthru
          _
        // Predicated region
        $region33: #{tpu_custom_call.1} parent=27 // pred_check
          %p161 = pneg %p62
        $region34: #{tpu_custom_call.1} parent=27 // pred_check_branch
          %163 = sbr.rel (%p161) target = $region36
        $region35: #{tpu_custom_call.1} parent=27 // pred_region
          %165 = dma.done [#allocation6], 2048
        $region36: #{tpu_custom_call.1} parent=27 // pred_fallthru
          _
        %s166 = sand.u32 %s28, 1
        %s167 = scalar_lea.sflag [#allocation3], %s166
        %s168 = sand.u32 %s28, 1
        %s169 = smul.addr %s168, 128
        %s170 = scalar_lea.vmem [#allocation2], %s169
        %p171 = pneg %p41
        %p172 = pneg %p38
        %p173 = pneg %p62
        %p174 = pneg %p59
        %p175 = pneg %p88
        %p176 = pneg %p85
        %s177 = sand.u32 %s75, 1
        %s178 = scalar_lea.sflag [#allocation4], %s177
        %s179 = sand.u32 %s75, 1
        %s180 = smul.addr %s179, 64
        %s181 = scalar_lea.vmem [#allocation7], %s180
        %s182 = smul.u32 16, %s20
        %s183 = smul.u32 16, %s20
        %v184 = vld [vmem:[%s155] sm:$0xff]
        %v185 = vld [vmem:[%s155 + $0x8] sm:$0xff]
        %v186 = vld [vmem:[%s155 + $0x10] sm:$0xff]
        %v187 = vld [vmem:[%s155 + $0x18] sm:$0xff]
        %v188 = vld [vmem:[%s155 + $0x20] sm:$0xff]
        %v189 = vld [vmem:[%s155 + $0x28] sm:$0xff]
        %v190 = vld [vmem:[%s155 + $0x30] sm:$0xff]
        %v191 = vld [vmem:[%s155 + $0x38] sm:$0xff]
        %v192 = vld [vmem:[%s155 + $0x40] sm:$0xff]
        %v193 = vld [vmem:[%s155 + $0x48] sm:$0xff]
        %v194 = vld [vmem:[%s155 + $0x50] sm:$0xff]
        %v195 = vld [vmem:[%s155 + $0x58] sm:$0xff]
        %v196 = vld [vmem:[%s155 + $0x60] sm:$0xff]
        %v197 = vld [vmem:[%s155 + $0x68] sm:$0xff]
        %v198 = vld [vmem:[%s155 + $0x70] sm:$0xff]
        %v199 = vld [vmem:[%s155 + $0x78] sm:$0xff]
        %v200 = vld [vmem:[#allocation5] sm:$0xf]
        %v201 = vld [vmem:[#allocation5 + $0x4] sm:$0xf]
        %v202 = vld [vmem:[#allocation5 + $0x8] sm:$0xf]
        %v203 = vld [vmem:[#allocation5 + $0xc] sm:$0xf]
        %v204 = vld [vmem:[#allocation5 + $0x10] sm:$0xf]
        %v205 = vld [vmem:[#allocation5 + $0x14] sm:$0xf]
        %v206 = vld [vmem:[#allocation5 + $0x18] sm:$0xf]
        %v207 = vld [vmem:[#allocation5 + $0x1c] sm:$0xf]
        %v208 = vld [vmem:[#allocation5 + $0x20] sm:$0xf]
        %v209 = vld [vmem:[#allocation5 + $0x24] sm:$0xf]
        %v210 = vld [vmem:[#allocation5 + $0x28] sm:$0xf]
        %v211 = vld [vmem:[#allocation5 + $0x2c] sm:$0xf]
        %v212 = vld [vmem:[#allocation5 + $0x30] sm:$0xf]
        %v213 = vld [vmem:[#allocation5 + $0x34] sm:$0xf]
        %v214 = vld [vmem:[#allocation5 + $0x38] sm:$0xf]
        %v215 = vld [vmem:[#allocation5 + $0x3c] sm:$0xf]
        %v216 = vld [vmem:[#allocation5 + $0x40] sm:$0xf]
        %v217 = vld [vmem:[#allocation5 + $0x44] sm:$0xf]
        %v218 = vld [vmem:[#allocation5 + $0x48] sm:$0xf]
        %v219 = vld [vmem:[#allocation5 + $0x4c] sm:$0xf]
        %v220 = vld [vmem:[#allocation5 + $0x50] sm:$0xf]
        %v221 = vld [vmem:[#allocation5 + $0x54] sm:$0xf]
        %v222 = vld [vmem:[#allocation5 + $0x58] sm:$0xf]
        %v223 = vld [vmem:[#allocation5 + $0x5c] sm:$0xf]
        %v224 = vld [vmem:[#allocation5 + $0x60] sm:$0xf]
        %v225 = vld [vmem:[#allocation5 + $0x64] sm:$0xf]
        %v226 = vld [vmem:[#allocation5 + $0x68] sm:$0xf]
        %v227 = vld [vmem:[#allocation5 + $0x6c] sm:$0xf]
        %v228 = vld [vmem:[#allocation5 + $0x70] sm:$0xf]
        %v229 = vld [vmem:[#allocation5 + $0x74] sm:$0xf]
        %v230 = vld [vmem:[#allocation5 + $0x78] sm:$0xf]
        %v231 = vld [vmem:[#allocation5 + $0x7c] sm:$0xf]
        %v248 = vunpack.c.l.b16 %v184
        %v249 = vunpack.c.h.b16 %v184
        %v250 = vunpack.c.l.b16 %v185
        %v251 = vunpack.c.h.b16 %v185
        %v252 = vunpack.c.l.b16 %v186
        %v253 = vunpack.c.h.b16 %v186
        %v254 = vunpack.c.l.b16 %v187
        %v255 = vunpack.c.h.b16 %v187
        %v256 = vunpack.c.l.b16 %v188
        %v257 = vunpack.c.h.b16 %v188
        %v258 = vunpack.c.l.b16 %v189
        %v259 = vunpack.c.h.b16 %v189
        %v260 = vunpack.c.l.b16 %v190
        %v261 = vunpack.c.h.b16 %v190
        %v262 = vunpack.c.l.b16 %v191
        %v263 = vunpack.c.h.b16 %v191
        %v264 = vunpack.c.l.b16 %v192
        %v265 = vunpack.c.h.b16 %v192
        %v266 = vunpack.c.l.b16 %v193
        %v267 = vunpack.c.h.b16 %v193
        %v268 = vunpack.c.l.b16 %v194
        %v269 = vunpack.c.h.b16 %v194
        %v270 = vunpack.c.l.b16 %v195
        %v271 = vunpack.c.h.b16 %v195
        %v272 = vunpack.c.l.b16 %v196
        %v273 = vunpack.c.h.b16 %v196
        %v274 = vunpack.c.l.b16 %v197
        %v275 = vunpack.c.h.b16 %v197
        %v276 = vunpack.c.l.b16 %v198
        %v277 = vunpack.c.h.b16 %v198
        %v278 = vunpack.c.l.b16 %v199
        %v279 = vunpack.c.h.b16 %v199
        %v280 = vpack.c.b16 %v250, %v248
        %v281 = vpack.c.b16 %v251, %v249
        %v282 = vpack.c.b16 %v254, %v252
        %v283 = vpack.c.b16 %v255, %v253
        %v284 = vpack.c.b16 %v258, %v256
        %v285 = vpack.c.b16 %v259, %v257
        %v286 = vpack.c.b16 %v262, %v260
        %v287 = vpack.c.b16 %v263, %v261
        %v288 = vpack.c.b16 %v266, %v264
        %v289 = vpack.c.b16 %v267, %v265
        %v290 = vpack.c.b16 %v270, %v268
        %v291 = vpack.c.b16 %v271, %v269
        %v292 = vpack.c.b16 %v274, %v272
        %v293 = vpack.c.b16 %v275, %v273
        %v294 = vpack.c.b16 %v278, %v276
        %v295 = vpack.c.b16 %v279, %v277
        %v344 = vunpack.c.l.b16 %v200
        %v345 = vunpack.c.l.b16 %v201
        %v346 = vunpack.c.l.b16 %v202
        %v347 = vunpack.c.l.b16 %v203
        %v348 = vunpack.c.l.b16 %v204
        %v349 = vunpack.c.l.b16 %v205
        %v350 = vunpack.c.l.b16 %v206
        %v351 = vunpack.c.l.b16 %v207
        %v352 = vunpack.c.l.b16 %v208
        %v353 = vunpack.c.l.b16 %v209
        %v354 = vunpack.c.l.b16 %v210
        %v355 = vunpack.c.l.b16 %v211
        %v356 = vunpack.c.l.b16 %v212
        %v357 = vunpack.c.l.b16 %v213
        %v358 = vunpack.c.l.b16 %v214
        %v359 = vunpack.c.l.b16 %v215
        %v360 = vunpack.c.l.b16 %v216
        %v361 = vunpack.c.l.b16 %v217
        %v362 = vunpack.c.l.b16 %v218
        %v363 = vunpack.c.l.b16 %v219
        %v364 = vunpack.c.l.b16 %v220
        %v365 = vunpack.c.l.b16 %v221
        %v366 = vunpack.c.l.b16 %v222
        %v367 = vunpack.c.l.b16 %v223
        %v368 = vunpack.c.l.b16 %v224
        %v369 = vunpack.c.l.b16 %v225
        %v370 = vunpack.c.l.b16 %v226
        %v371 = vunpack.c.l.b16 %v227
        %v372 = vunpack.c.l.b16 %v228
        %v373 = vunpack.c.l.b16 %v229
        %v374 = vunpack.c.l.b16 %v230
        %v375 = vunpack.c.l.b16 %v231
        %v376 = vpack.c.b16 %v345, %v344
        %v377 = vpack.c.b16 %v347, %v346
        %v378 = vpack.c.b16 %v349, %v348
        %v379 = vpack.c.b16 %v351, %v350
        %v380 = vpack.c.b16 %v353, %v352
        %v381 = vpack.c.b16 %v355, %v354
        %v382 = vpack.c.b16 %v357, %v356
        %v383 = vpack.c.b16 %v359, %v358
        %v384 = vpack.c.b16 %v361, %v360
        %v385 = vpack.c.b16 %v363, %v362
        %v386 = vpack.c.b16 %v365, %v364
        %v387 = vpack.c.b16 %v367, %v366
        %v388 = vpack.c.b16 %v369, %v368
        %v389 = vpack.c.b16 %v371, %v370
        %v390 = vpack.c.b16 %v373, %v372
        %v391 = vpack.c.b16 %v375, %v374
        %408 = vmatpush.bf16.msra.mxu0 %v383
        %409 = vmatpush.bf16.msra.mxu0 %v382
        %410 = vmatpush.bf16.msra.mxu0 %v381
        %411 = vmatpush.bf16.msra.mxu0 %v380
        %412 = vmatpush.bf16.msra.mxu0 %v379
        %413 = vmatpush.bf16.msra.mxu0 %v378
        %414 = vmatpush.bf16.msra.mxu0 %v377
        %415 = vmatpush.bf16.msra.mxu0 %v376
        %416 = vmatmul.bf16.gmra.mxu0 %v280
        %v417 = vpop.f32.mrf.mxu0
        %v418 = vadd.f32 0.0, %v417
        %v419 = vpop.f32.mrf.mxu0
        %v420 = vadd.f32 0.0, %v419
        %421 = vmatmul.bf16.gmra.mxu0 %v282
        %v422 = vpop.f32.mrf.mxu0
        %v423 = vadd.f32 0.0, %v422
        %v424 = vpop.f32.mrf.mxu0
        %v425 = vadd.f32 0.0, %v424
        %426 = vmatmul.bf16.gmra.mxu0 %v284
        %v427 = vpop.f32.mrf.mxu0
        %v428 = vadd.f32 0.0, %v427
        %v429 = vpop.f32.mrf.mxu0
        %v430 = vadd.f32 0.0, %v429
        %431 = vmatmul.bf16.gmra.mxu0 %v286
        %v432 = vpop.f32.mrf.mxu0
        %v433 = vadd.f32 0.0, %v432
        %v434 = vpop.f32.mrf.mxu0
        %v435 = vadd.f32 0.0, %v434
        %436 = vmatmul.bf16.gmra.mxu0 %v288
        %v437 = vpop.f32.mrf.mxu0
        %v438 = vadd.f32 0.0, %v437
        %v439 = vpop.f32.mrf.mxu0
        %v440 = vadd.f32 0.0, %v439
        %441 = vmatmul.bf16.gmra.mxu0 %v290
        %v442 = vpop.f32.mrf.mxu0
        %v443 = vadd.f32 0.0, %v442
        %v444 = vpop.f32.mrf.mxu0
        %v445 = vadd.f32 0.0, %v444
        %446 = vmatmul.bf16.gmra.mxu0 %v292
        %v447 = vpop.f32.mrf.mxu0
        %v448 = vadd.f32 0.0, %v447
        %v449 = vpop.f32.mrf.mxu0
        %v450 = vadd.f32 0.0, %v449
        %451 = vmatmul.bf16.gmra.mxu0 %v294
        %v452 = vpop.f32.mrf.mxu0
        %v453 = vadd.f32 0.0, %v452
        %v454 = vpop.f32.mrf.mxu0
        %v455 = vadd.f32 0.0, %v454
        %456 = vdwg.mxu0
        %457 = vmatpush.bf16.msra.mxu0 %v391
        %458 = vmatpush.bf16.msra.mxu0 %v390
        %459 = vmatpush.bf16.msra.mxu0 %v389
        %460 = vmatpush.bf16.msra.mxu0 %v388
        %461 = vmatpush.bf16.msra.mxu0 %v387
        %462 = vmatpush.bf16.msra.mxu0 %v386
        %463 = vmatpush.bf16.msra.mxu0 %v385
        %464 = vmatpush.bf16.msra.mxu0 %v384
        %465 = vmatmul.bf16.gmra.mxu0 %v281
        %v466 = vpop.f32.mrf.mxu0
        %v467 = vadd.f32 %v418, %v466
        %v468 = vpop.f32.mrf.mxu0
        %v469 = vadd.f32 %v420, %v468
        %470 = vmatmul.bf16.gmra.mxu0 %v283
        %v471 = vpop.f32.mrf.mxu0
        %v472 = vadd.f32 %v423, %v471
        %v473 = vpop.f32.mrf.mxu0
        %v474 = vadd.f32 %v425, %v473
        %475 = vmatmul.bf16.gmra.mxu0 %v285
        %v476 = vpop.f32.mrf.mxu0
        %v477 = vadd.f32 %v428, %v476
        %v478 = vpop.f32.mrf.mxu0
        %v479 = vadd.f32 %v430, %v478
        %480 = vmatmul.bf16.gmra.mxu0 %v287
        %v481 = vpop.f32.mrf.mxu0
        %v482 = vadd.f32 %v433, %v481
        %v483 = vpop.f32.mrf.mxu0
        %v484 = vadd.f32 %v435, %v483
        %485 = vmatmul.bf16.gmra.mxu0 %v289
        %v486 = vpop.f32.mrf.mxu0
        %v487 = vadd.f32 %v438, %v486
        %v488 = vpop.f32.mrf.mxu0
        %v489 = vadd.f32 %v440, %v488
        %490 = vmatmul.bf16.gmra.mxu0 %v291
        %v491 = vpop.f32.mrf.mxu0
        %v492 = vadd.f32 %v443, %v491
        %v493 = vpop.f32.mrf.mxu0
        %v494 = vadd.f32 %v445, %v493
        %495 = vmatmul.bf16.gmra.mxu0 %v293
        %v496 = vpop.f32.mrf.mxu0
        %v497 = vadd.f32 %v448, %v496
        %v498 = vpop.f32.mrf.mxu0
        %v499 = vadd.f32 %v450, %v498
        %500 = vmatmul.bf16.gmra.mxu0 %v295
        %v501 = vpop.f32.mrf.mxu0
        %v502 = vadd.f32 %v453, %v501
        %v503 = vpop.f32.mrf.mxu0
        %v504 = vadd.f32 %v455, %v503
        %505 = vdwg.mxu0
        %v506 = vpack.c.bf16 %v467, %v467
        %v507 = vpack.c.bf16 %v469, %v469
        %v508 = vpack.c.bf16 %v472, %v472
        %v509 = vpack.c.bf16 %v474, %v474
        %v510 = vpack.c.bf16 %v477, %v477
        %v511 = vpack.c.bf16 %v479, %v479
        %v512 = vpack.c.bf16 %v482, %v482
        %v513 = vpack.c.bf16 %v484, %v484
        %v514 = vpack.c.bf16 %v487, %v487
        %v515 = vpack.c.bf16 %v489, %v489
        %v516 = vpack.c.bf16 %v492, %v492
        %v517 = vpack.c.bf16 %v494, %v494
        %v518 = vpack.c.bf16 %v497, %v497
        %v519 = vpack.c.bf16 %v499, %v499
        %v520 = vpack.c.bf16 %v502, %v502
        %v521 = vpack.c.bf16 %v504, %v504
        %522 = vst [vmem:[%s181] sm:$0xf] %v506
        %523 = vst [vmem:[%s181 + $0x4] sm:$0xf] %v507
        %524 = vst [vmem:[%s181 + $0x8] sm:$0xf] %v508
        %525 = vst [vmem:[%s181 + $0xc] sm:$0xf] %v509
        %526 = vst [vmem:[%s181 + $0x10] sm:$0xf] %v510
        %527 = vst [vmem:[%s181 + $0x14] sm:$0xf] %v511
        %528 = vst [vmem:[%s181 + $0x18] sm:$0xf] %v512
        %529 = vst [vmem:[%s181 + $0x1c] sm:$0xf] %v513
        %530 = vst [vmem:[%s181 + $0x20] sm:$0xf] %v514
        %531 = vst [vmem:[%s181 + $0x24] sm:$0xf] %v515
        %532 = vst [vmem:[%s181 + $0x28] sm:$0xf] %v516
        %533 = vst [vmem:[%s181 + $0x2c] sm:$0xf] %v517
        %534 = vst [vmem:[%s181 + $0x30] sm:$0xf] %v518
        %535 = vst [vmem:[%s181 + $0x34] sm:$0xf] %v519
        %536 = vst [vmem:[%s181 + $0x38] sm:$0xf] %v520
        %537 = vst [vmem:[%s181 + $0x3c] sm:$0xf] %v521
        %s538 = sand.u32 %s75, 1
        %s539 = scalar_lea.sflag [#allocation4], %s538
        %s540 = sand.u32 %s75, 1
        %s541 = smul.addr %s540, 64
        %s542 = scalar_lea.vmem [#allocation7], %s541
        // Predicated region
        $region37: #{tpu_custom_call.1} parent=27 // pred_check
          %p543 = pneg %p85
        $region38: #{tpu_custom_call.1} parent=27 // pred_check_branch
          %545 = sbr.rel (%p543) target = $region40
        $region39: #{tpu_custom_call.1} parent=27 // pred_region
          %s546 = smul.u32 16, %s20
          %548 = vsyncadd %s539, 0
          %s549 = smul.addr %s546, 4
          %s550 = scalar_lea.hbm %s2, %s549
          %s551 = sshll.u32 %s542, 4
          %s552 = int_to_ptr.vmem [resolvable:$true] %s551
          %s553 = sshll.u32 %s550, 4
          %s554 = int_to_ptr.hbm [resolvable:$true] %s553
          %559 = dma.vmem_to_hbm [thread:$0]  %s552, 1024, %s554, %s539, 64, 64, 4
        $region40: #{tpu_custom_call.1} parent=27 // pred_fallthru
          _
      $region28: #{tpu_custom_call.1} parent=5 // pred_fallthru
        _
      %p560 = scmp.le.s32.totalorder 2, %s15
      // Predicated region
      $region41: #{tpu_custom_call.1} parent=5 // pred_check
        %p561 = pneg %p560
      $region42: #{tpu_custom_call.1} parent=5 // pred_check_branch
        %563 = sbr.rel (%p561) target = $region44
      $region43: #{tpu_custom_call.1} parent=5 // pred_region
        %s564 = ssub.s32 %s15, 2
        // Predicated region
        $region45: #{tpu_custom_call.1} parent=43 // pred_check
          %p565 = pneg %p91
        $region46: #{tpu_custom_call.1} parent=43 // pred_check_branch
          %567 = sbr.rel (%p565) target = $region48
        $region47: #{tpu_custom_call.1} parent=43 // pred_region
          %s568 = sand.u32 %s76, 1
          %s569 = scalar_lea.sflag [#allocation4], %s568
          %s570 = sand.u32 %s76, 1
          %s571 = smul.addr %s570, 64
          %s572 = scalar_lea.vmem [#allocation7], %s571
          %574 = dma.done %s569, 1024
        $region48: #{tpu_custom_call.1} parent=43 // pred_fallthru
          _
      $region44: #{tpu_custom_call.1} parent=5 // pred_fallthru
        _
    $region6: #{tpu_custom_call.1} parent=1 // loop_footer
      %s19 = sadd.s32 1, %s15
    $region7: #{tpu_custom_call.1} parent=1 // loop_footer_branch
      %14 = sbr.rel target = $region3
    $region8: #{tpu_custom_call.1} parent=1 // loop_exit
      _
    %575 = vsyncpa [#allocation3], 1
    %s576 = scalar_lea.sflag [#allocation3], 1
    %577 = vsyncpa %s576, 1
    %578 = vsyncpa [#allocation6], 1
    %579 = vsyncpa [#allocation4], 1
    %s580 = scalar_lea.sflag [#allocation4], 1
    %581 = vsyncpa %s580, 1

</llo_original>
